<compile_context>
chip_gen: v7x
topology: tpu7x:2x2x1
jax: 0.10.0
libtpu: 0.0.40
codegen_flags: <defaults>
</compile_context>

<pallas_src>
import functools

import jax
import jax.numpy as jnp
from jax.experimental import pallas as pl
from jax.experimental.pallas import tpu as pltpu

LANE = 128
SUBLANE = 8


def _round_up(n, m):
    return ((n + m - 1) // m) * m


def _cdiv(a, b):
    return -(-a // b)


def actor_kernel(x_ref, w1_ref, b1_ref, w2_ref, b2_ref, w3_ref, b3_ref, out_ref):
    mm_dtype = w1_ref.dtype
    # fc1 + relu  (x loaded as f32, cast to bf16 on the VPU; f32 MXU accumulation)
    x = x_ref[...].astype(mm_dtype)
    h1 = jnp.dot(x, w1_ref[...], preferred_element_type=jnp.float32)
    h1 = jnp.maximum(h1 + b1_ref[...], 0.0)
    # fc2 + relu  (hidden dims are lane-padded to 128 -> dense vregs)
    h2 = jnp.dot(h1.astype(mm_dtype), w2_ref[...],
                 preferred_element_type=jnp.float32)
    h2 = jnp.maximum(h2 + b2_ref[...], 0.0)
    # fc3 + tanh  (output feature axis padded to a lane-dense 128 slab)
    h3 = jnp.dot(h2.astype(mm_dtype), w3_ref[...],
                 preferred_element_type=jnp.float32)
    out_ref[...] = jnp.tanh(h3 + b3_ref[...]).astype(out_ref.dtype)


def prepare_actor_params(params, matmul_dtype=jnp.bfloat16):
    """One-time conversion of PyTorch-convention params into kernel layout.

    - weights transposed to (in, out) so the kernel does plain x @ W
    - hidden1, hidden2 and the fc3 output dim are zero-padded to multiples of
      128 (lane-dense activations, biases and matmul N/K dims)
    - biases kept as f32 (1, out) rows (broadcast along the batch/sublane axis)
    - matmul weights cast to `matmul_dtype` (bf16 MXU with f32 accumulation)

    Returns (kernel_params_dict, nb_actions).
    """
    hidden1, nb_states = params["w1"].shape
    hidden2 = params["w2"].shape[0]
    nb_actions = params["w3"].shape[0]

    h1p = _round_up(max(hidden1, LANE), LANE)
    h2p = _round_up(max(hidden2, LANE), LANE)
    nap = _round_up(max(nb_actions, LANE), LANE)

    w1 = jnp.pad(params["w1"].T, ((0, 0), (0, h1p - hidden1)))
    w2 = jnp.pad(params["w2"].T, ((0, h1p - hidden1), (0, h2p - hidden2)))
    w3 = jnp.pad(params["w3"].T, ((0, h2p - hidden2), (0, nap - nb_actions)))
    b1 = jnp.pad(params["b1"], (0, h1p - hidden1))
    b2 = jnp.pad(params["b2"], (0, h2p - hidden2))
    b3 = jnp.pad(params["b3"], (0, nap - nb_actions))

    kp = {
        "w1": w1.astype(matmul_dtype),
        "w2": w2.astype(matmul_dtype),
        "w3": w3.astype(matmul_dtype),
        "b1": b1[None, :].astype(jnp.float32),
        "b2": b2[None, :].astype(jnp.float32),
        "b3": b3[None, :].astype(jnp.float32),
    }
    return kp, nb_actions


def _batch_tile(B, block_b):
    """Pick (tile_rows, padded_rows) for the batch axis.

    Guarantees >= 2 grid steps when B >= 16 (so ("parallel",) shards across
    v7x's two TensorCores) and sizes the tile via cdiv so the last tile is
    not nearly empty (B=260 -> 272 padded rows with 2x136-row tiles).
    """
    b_sub = _round_up(B, SUBLANE)
    if b_sub >= 2 * SUBLANE:
        n_steps = max(2, _cdiv(b_sub, block_b))
        tb = _round_up(_cdiv(b_sub, n_steps), SUBLANE)
    else:
        tb = b_sub
    b_pad = _round_up(b_sub, tb)
    return tb, b_pad


@functools.partial(jax.jit, static_argnames=("nb_actions", "block_b", "out_dtype"))
def actor_forward(x, kp, *, nb_actions, block_b=512, out_dtype=jnp.bfloat16):
    """x: [B, nb_states] float32. kp: kernel params from prepare_actor_params."""
    B, nb_states = x.shape
    n_out_pad = kp["w3"].shape[1]

    tb, b_pad = _batch_tile(B, block_b)
    if b_pad != B:
        # Only wrapper-side op on x; skipped entirely when B is tile-aligned.
        x = jnp.pad(x, ((0, b_pad - B), (0, 0)))

    tile_batch = lambda i: (i, 0)   # x / out tiled along the batch axis
    resident = lambda i: (0, 0)     # weights / biases stay resident in VMEM

    out = pl.pallas_call(
        actor_kernel,
        out_shape=jax.ShapeDtypeStruct((b_pad, n_out_pad), out_dtype),
        grid_spec=pltpu.PrefetchScalarGridSpec(
            num_scalar_prefetch=0,
            grid=(b_pad // tb,),
            in_specs=[
                pl.BlockSpec((tb, nb_states), tile_batch),
                pl.BlockSpec(kp["w1"].shape, resident),
                pl.BlockSpec(kp["b1"].shape, resident),
                pl.BlockSpec(kp["w2"].shape, resident),
                pl.BlockSpec(kp["b2"].shape, resident),
                pl.BlockSpec(kp["w3"].shape, resident),
                pl.BlockSpec(kp["b3"].shape, resident),
            ],
            out_specs=pl.BlockSpec((tb, n_out_pad), tile_batch),
        ),
        compiler_params=pltpu.CompilerParams(
            dimension_semantics=("parallel",),   # both TCs on v7x; neutral on v5e/v6e
        ),
    )(x, kp["w1"], kp["b1"], kp["w2"], kp["b2"], kp["w3"], kp["b3"])

    return out[:B, :nb_actions]


def init_actor_params(key, nb_states, nb_actions, hidden1, hidden2, init_w=0.003):
    """Deterministic init matching the PyTorch module's init_weights semantics.

    fanin_init uses size[0] of the weight tensor (== out_features for
    nn.Linear) as the fan-in, reproducing the original code's quirk.
    """
    k1, k2, k3, kb1, kb2, kb3 = jax.random.split(key, 6)

    def fanin_init(k, shape):
        v = 1.0 / jnp.sqrt(jnp.float32(shape[0]))
        return jax.random.uniform(k, shape, jnp.float32, minval=-v, maxval=v)

    def linear_bias_init(k, out_f, in_f):
        # PyTorch default Linear bias init: U(-1/sqrt(in_f), 1/sqrt(in_f))
        v = 1.0 / jnp.sqrt(jnp.float32(in_f))
        return jax.random.uniform(k, (out_f,), jnp.float32, minval=-v, maxval=v)

    return {
        # weights in PyTorch convention: (out_features, in_features)
        "w1": fanin_init(k1, (hidden1, nb_states)),
        "w2": fanin_init(k2, (hidden2, hidden1)),
        "w3": jax.random.uniform(k3, (nb_actions, hidden2), jnp.float32,
                                 minval=-init_w, maxval=init_w),
        "b1": linear_bias_init(kb1, hidden1, nb_states),
        "b2": linear_bias_init(kb2, hidden2, hidden1),
        "b3": linear_bias_init(kb3, nb_actions, hidden2),
    }


if __name__ == "__main__":
    # Small shapes consistent with the module (nb_states -> h1 -> h2 -> nb_actions).
    batch = 4
    nb_states = 32
    hidden1 = 64
    hidden2 = 64
    nb_actions = 8

    key = jax.random.PRNGKey(0)
    kx, kp_key = jax.random.split(key)

    x = jax.random.normal(kx, (batch, nb_states), dtype=jnp.float32)
    params = init_actor_params(kp_key, nb_states, nb_actions, hidden1, hidden2)

    # One-time param prep (transposes / lane padding / bf16 cast hoisted out of
    # the per-step forward path).
    kernel_params, na = prepare_actor_params(params)

    out = actor_forward(x, kernel_params, nb_actions=na)
    out = jax.block_until_ready(out)

    # Pure-JAX f32 reference of the forward semantics (PyTorch convention).
    def ref(x, p):
        h = jnp.maximum(x @ p["w1"].T + p["b1"], 0.0)
        h = jnp.maximum(h @ p["w2"].T + p["b2"], 0.0)
        return jnp.tanh(h @ p["w3"].T + p["b3"])

    expected = ref(x, params)
    assert out.shape == (batch, nb_actions)
    # Tolerance accounts for bf16 MXU operands (f32 accumulation) + bf16 output.
    assert jnp.allclose(out.astype(jnp.float32), expected, atol=2e-2, rtol=2e-2)

    print("KERNEL_OK")
</pallas_src>

<mosaic_0001>
module attributes {stable_mosaic.version = 11 : i64} {
  func.func @actor_kernel(%arg0: i32, %arg1: memref<8x32xf32, #tpu.memory_space<vmem>>, %arg2: memref<32x128xbf16, #tpu.memory_space<vmem>>, %arg3: memref<1x128xf32, #tpu.memory_space<vmem>>, %arg4: memref<128x128xbf16, #tpu.memory_space<vmem>>, %arg5: memref<1x128xf32, #tpu.memory_space<vmem>>, %arg6: memref<128x128xbf16, #tpu.memory_space<vmem>>, %arg7: memref<1x128xf32, #tpu.memory_space<vmem>>, %arg8: memref<8x128xbf16, #tpu.memory_space<vmem>>) attributes {dimension_semantics = [#tpu.dimension_semantics<parallel>], iteration_bounds = array<i64: 1>, scalar_prefetch = 0 : i64, scratch_operands = 0 : i64, tpu.core_type = #tpu.core_type<tc>, window_params = [{transform_indices = @transform_0, window_bounds = array<i64: 8, 32>}, {pipeline_mode = #tpu.pipeline_mode<synchronous>, transform_indices = @transform_1, window_bounds = array<i64: 32, 128>}, {pipeline_mode = #tpu.pipeline_mode<synchronous>, transform_indices = @transform_2, window_bounds = array<i64: 1, 128>}, {pipeline_mode = #tpu.pipeline_mode<synchronous>, transform_indices = @transform_3, window_bounds = array<i64: 128, 128>}, {pipeline_mode = #tpu.pipeline_mode<synchronous>, transform_indices = @transform_4, window_bounds = array<i64: 1, 128>}, {pipeline_mode = #tpu.pipeline_mode<synchronous>, transform_indices = @transform_5, window_bounds = array<i64: 128, 128>}, {pipeline_mode = #tpu.pipeline_mode<synchronous>, transform_indices = @transform_6, window_bounds = array<i64: 1, 128>}, {transform_indices = @transform_7, window_bounds = array<i64: 8, 128>}]} {
    %c0 = arith.constant 0 : index
    %c0_0 = arith.constant 0 : index
    %0 = vector.load %arg1[%c0, %c0_0] : memref<8x32xf32, #tpu.memory_space<vmem>>, vector<8x32xf32>
    %1 = arith.truncf %0 : vector<8x32xf32> to vector<8x32xbf16>
    %c0_1 = arith.constant 0 : index
    %c0_2 = arith.constant 0 : index
    %2 = vector.load %arg2[%c0_1, %c0_2] : memref<32x128xbf16, #tpu.memory_space<vmem>>, vector<32x128xbf16>
    %cst = arith.constant dense<0.000000e+00> : vector<8x128xf32>
    %3 = tpu.matmul %1, %2, %cst {dimension_numbers = #tpu.dot_dimension_numbers<[1], [0], [0], [1], [0, 0, 1, 1], [], []>} : vector<8x32xbf16>, vector<32x128xbf16>, vector<8x128xf32> -> vector<8x128xf32>
    %c0_3 = arith.constant 0 : index
    %c0_4 = arith.constant 0 : index
    %4 = vector.load %arg3[%c0_3, %c0_4] : memref<1x128xf32, #tpu.memory_space<vmem>>, vector<1x128xf32>
    %5 = vector.broadcast %4 : vector<1x128xf32> to vector<8x128xf32>
    %6 = arith.addf %3, %5 : vector<8x128xf32>
    %cst_5 = arith.constant 0.000000e+00 : f32
    %7 = vector.broadcast %cst_5 : f32 to vector<8x128xf32>
    %8 = arith.maximumf %6, %7 : vector<8x128xf32>
    %9 = arith.truncf %8 : vector<8x128xf32> to vector<8x128xbf16>
    %c0_6 = arith.constant 0 : index
    %c0_7 = arith.constant 0 : index
    %10 = vector.load %arg4[%c0_6, %c0_7] : memref<128x128xbf16, #tpu.memory_space<vmem>>, vector<128x128xbf16>
    %cst_8 = arith.constant dense<0.000000e+00> : vector<8x128xf32>
    %11 = tpu.matmul %9, %10, %cst_8 {dimension_numbers = #tpu.dot_dimension_numbers<[1], [0], [0], [1], [0, 0, 1, 1], [], []>} : vector<8x128xbf16>, vector<128x128xbf16>, vector<8x128xf32> -> vector<8x128xf32>
    %c0_9 = arith.constant 0 : index
    %c0_10 = arith.constant 0 : index
    %12 = vector.load %arg5[%c0_9, %c0_10] : memref<1x128xf32, #tpu.memory_space<vmem>>, vector<1x128xf32>
    %13 = vector.broadcast %12 : vector<1x128xf32> to vector<8x128xf32>
    %14 = arith.addf %11, %13 : vector<8x128xf32>
    %cst_11 = arith.constant 0.000000e+00 : f32
    %15 = vector.broadcast %cst_11 : f32 to vector<8x128xf32>
    %16 = arith.maximumf %14, %15 : vector<8x128xf32>
    %17 = arith.truncf %16 : vector<8x128xf32> to vector<8x128xbf16>
    %c0_12 = arith.constant 0 : index
    %c0_13 = arith.constant 0 : index
    %18 = vector.load %arg6[%c0_12, %c0_13] : memref<128x128xbf16, #tpu.memory_space<vmem>>, vector<128x128xbf16>
    %cst_14 = arith.constant dense<0.000000e+00> : vector<8x128xf32>
    %19 = tpu.matmul %17, %18, %cst_14 {dimension_numbers = #tpu.dot_dimension_numbers<[1], [0], [0], [1], [0, 0, 1, 1], [], []>} : vector<8x128xbf16>, vector<128x128xbf16>, vector<8x128xf32> -> vector<8x128xf32>
    %c0_15 = arith.constant 0 : index
    %c0_16 = arith.constant 0 : index
    %20 = vector.load %arg7[%c0_15, %c0_16] : memref<1x128xf32, #tpu.memory_space<vmem>>, vector<1x128xf32>
    %21 = vector.broadcast %20 : vector<1x128xf32> to vector<8x128xf32>
    %22 = arith.addf %19, %21 : vector<8x128xf32>
    %23 = math.tanh %22 : vector<8x128xf32>
    %24 = arith.truncf %23 : vector<8x128xf32> to vector<8x128xbf16>
    %c0_17 = arith.constant 0 : index
    %c0_18 = arith.constant 0 : index
    %25 = vector.load %arg8[%c0_17, %c0_18] : memref<8x128xbf16, #tpu.memory_space<vmem>>, vector<8x128xbf16>
    tpu.vector_store %arg8[%c0_17, %c0_18], %24 {strides = array<i32>} : memref<8x128xbf16, #tpu.memory_space<vmem>>, vector<8x128xbf16>,
    return
  }
  func.func @transform_0(%arg0: i32) -> (i32, i32) {
    %c0_i32 = arith.constant 0 : i32
    %c0_i32_0 = arith.constant 0 : i32
    return %arg0, %c0_i32 : i32, i32
  }
  func.func @transform_1(%arg0: i32) -> (i32, i32) {
    %c0_i32 = arith.constant 0 : i32
    %c0_i32_0 = arith.constant 0 : i32
    %c0_i32_1 = arith.constant 0 : i32
    return %c0_i32, %c0_i32_0 : i32, i32
  }
  func.func @transform_2(%arg0: i32) -> (i32, i32) {
    %c0_i32 = arith.constant 0 : i32
    %c0_i32_0 = arith.constant 0 : i32
    %c0_i32_1 = arith.constant 0 : i32
    return %c0_i32, %c0_i32_0 : i32, i32
  }
  func.func @transform_3(%arg0: i32) -> (i32, i32) {
    %c0_i32 = arith.constant 0 : i32
    %c0_i32_0 = arith.constant 0 : i32
    %c0_i32_1 = arith.constant 0 : i32
    return %c0_i32, %c0_i32_0 : i32, i32
  }
  func.func @transform_4(%arg0: i32) -> (i32, i32) {
    %c0_i32 = arith.constant 0 : i32
    %c0_i32_0 = arith.constant 0 : i32
    %c0_i32_1 = arith.constant 0 : i32
    return %c0_i32, %c0_i32_0 : i32, i32
  }
  func.func @transform_5(%arg0: i32) -> (i32, i32) {
    %c0_i32 = arith.constant 0 : i32
    %c0_i32_0 = arith.constant 0 : i32
    %c0_i32_1 = arith.constant 0 : i32
    return %c0_i32, %c0_i32_0 : i32, i32
  }
  func.func @transform_6(%arg0: i32) -> (i32, i32) {
    %c0_i32 = arith.constant 0 : i32
    %c0_i32_0 = arith.constant 0 : i32
    %c0_i32_1 = arith.constant 0 : i32
    return %c0_i32, %c0_i32_0 : i32, i32
  }
  func.func @transform_7(%arg0: i32) -> (i32, i32) {
    %c0_i32 = arith.constant 0 : i32
    %c0_i32_0 = arith.constant 0 : i32
    return %arg0, %c0_i32 : i32, i32
  }
}

</mosaic_0001>

<llo_original>
// kernel: actor_forward.1
$region0: #{actor_forward.1}
  #allocation0 [shape = 'u32[]', space=smem, size = 0x4, offset = 0x4, fixed_abs, tag = 'smem constant byte address 0x4 - core index']
  #allocation1 [shape = 'u32[144,128]{1,0:T(1,128)}', space=vmem, size = 0x12000, scoped, tag = 'internal scratch']
  %s0 = inlined_call_operand.vmem [shape: f32[8,32], index: 0, kind: input, shape index: {}]
  %s1 = inlined_call_operand.vmem [shape: bf16[32,128], index: 1, kind: input, shape index: {}]
  %s2 = inlined_call_operand.vmem [shape: f32[1,128], index: 2, kind: input, shape index: {}]
  %s3 = inlined_call_operand.hbm [shape: bf16[128,128], index: 3, kind: input, shape index: {}]
  %s4 = inlined_call_operand.vmem [shape: f32[1,128], index: 4, kind: input, shape index: {}]
  %s5 = inlined_call_operand.hbm [shape: bf16[128,128], index: 5, kind: input, shape index: {}]
  %s6 = inlined_call_operand.vmem [shape: f32[1,128], index: 6, kind: input, shape index: {}]
  %s7 = inlined_call_operand.vmem [shape: bf16[8,128], index: 7, kind: output, shape index: {}]
  %s8 = sld [smem:[#allocation0]]
  $region46: #{actor_forward.1} parent=0
    _
  %s10 = ssub.s32 1, %s8
  %s11 = scalar_select 0, %s10, %s8
  $region1: #{actor_forward.1} parent=0
    #allocation2 [shape = 'u8[32768]{0}', space=vmem, size = 0x8000, scoped, tag = 'input window, operand 3, single buffered']
    #allocation3 [shape = 's32[1]{0}', space=sflag, size = 0x4, scoped, tag = 'scoped memory for actor_forward.1']
    #allocation4 [shape = 'u8[32768]{0}', space=vmem, size = 0x8000, scoped, tag = 'input window, operand 5, single buffered']
    #allocation5 [shape = 's32[1]{0}', space=sflag, size = 0x4, scoped, tag = 'scoped memory for actor_forward.1']
    %12 = vsyncpa [#allocation3], 0
    %13 = vsyncpa [#allocation5], 0
    // Predicated region
    $region2: #{actor_forward.1} parent=1 // pred_check
      _
    $region3: #{actor_forward.1} parent=1 // pred_check_branch
      %15 = sbr.rel (0) target = $region5
    $region4: #{actor_forward.1} parent=1 // pred_region
      _
    $region5: #{actor_forward.1} parent=1 // pred_fallthru
      _
    // Predicated region
    $region6: #{actor_forward.1} parent=1 // pred_check
      _
    $region7: #{actor_forward.1} parent=1 // pred_check_branch
      %17 = sbr.rel (0) target = $region9
    $region8: #{actor_forward.1} parent=1 // pred_region
      _
    $region9: #{actor_forward.1} parent=1 // pred_fallthru
      _
    // Predicated region
    $region10: #{actor_forward.1} parent=1 // pred_check
      _
    $region11: #{actor_forward.1} parent=1 // pred_check_branch
      %19 = sbr.rel (0) target = $region13
    $region12: #{actor_forward.1} parent=1 // pred_region
      _
    $region13: #{actor_forward.1} parent=1 // pred_fallthru
      _
    // Predicated region
    $region14: #{actor_forward.1} parent=1 // pred_check
      _
    $region15: #{actor_forward.1} parent=1 // pred_check_branch
      %21 = sbr.rel (0) target = $region17
    $region16: #{actor_forward.1} parent=1 // pred_region
      %s23 = ssub.s32 1024, 1024
      %24 = vsyncadd [#allocation3], %s23
      %s25 = sshll.u32 [#allocation2], 4
      %s26 = int_to_ptr.vmem [resolvable:$true] %s25
      %31 = dma.hbm_to_vmem [thread:$0]  %s3, 1024, %s26, [#allocation3], 64, 64, 4
    $region17: #{actor_forward.1} parent=1 // pred_fallthru
      _
    // Predicated region
    $region18: #{actor_forward.1} parent=1 // pred_check
      _
    $region19: #{actor_forward.1} parent=1 // pred_check_branch
      %33 = sbr.rel (0) target = $region21
    $region20: #{actor_forward.1} parent=1 // pred_region
      _
    $region21: #{actor_forward.1} parent=1 // pred_fallthru
      _
    // Predicated region
    $region22: #{actor_forward.1} parent=1 // pred_check
      _
    $region23: #{actor_forward.1} parent=1 // pred_check_branch
      %35 = sbr.rel (0) target = $region25
    $region24: #{actor_forward.1} parent=1 // pred_region
      %s37 = ssub.s32 1024, 1024
      %38 = vsyncadd [#allocation5], %s37
      %s39 = sshll.u32 [#allocation4], 4
      %s40 = int_to_ptr.vmem [resolvable:$true] %s39
      %45 = dma.hbm_to_vmem [thread:$0]  %s5, 1024, %s40, [#allocation5], 64, 64, 4
    $region25: #{actor_forward.1} parent=1 // pred_fallthru
      _
    // Predicated region
    $region26: #{actor_forward.1} parent=1 // pred_check
      _
    $region27: #{actor_forward.1} parent=1 // pred_check_branch
      %47 = sbr.rel (0) target = $region29
    $region28: #{actor_forward.1} parent=1 // pred_region
      _
    $region29: #{actor_forward.1} parent=1 // pred_fallthru
      _
    // Predicated region
    $region30: #{actor_forward.1} parent=1 // pred_check
      _
    $region31: #{actor_forward.1} parent=1 // pred_check_branch
      %49 = sbr.rel (0) target = $region33
    $region32: #{actor_forward.1} parent=1 // pred_region
      %50 = dma.done [#allocation3], 1024
    $region33: #{actor_forward.1} parent=1 // pred_fallthru
      _
    // Predicated region
    $region34: #{actor_forward.1} parent=1 // pred_check
      _
    $region35: #{actor_forward.1} parent=1 // pred_check_branch
      %52 = sbr.rel (0) target = $region37
    $region36: #{actor_forward.1} parent=1 // pred_region
      %53 = dma.done [#allocation5], 1024
    $region37: #{actor_forward.1} parent=1 // pred_fallthru
      _
    %v55 = vld [vmem:[%s0] sm:$0xff]
    %v56 = vpack.c.bf16 %v55, %v55
    %v57 = vld [vmem:[%s1] sm:$0xf]
    %v58 = vld [vmem:[%s1 + $0x4] sm:$0xf]
    %v59 = vld [vmem:[%s1 + $0x8] sm:$0xf]
    %v60 = vld [vmem:[%s1 + $0xc] sm:$0xf]
    %v61 = vld [vmem:[%s2] sm:$0x1]
    %v63 = vlaneseq
    %v64 = vshrl.u32 %v63, 7
    %v65 = vsub.s32 0, %v64
    %v66 = vrot.slane %v61, %v65
    %v72 = vunpack.c.l.b16 %v57
    %v73 = vunpack.c.l.b16 %v58
    %v74 = vunpack.c.l.b16 %v59
    %v75 = vunpack.c.l.b16 %v60
    %v76 = vpack.c.b16 %v73, %v72
    %v77 = vpack.c.b16 %v75, %v74
    %vm80 = vcmask 261120
    %v82 = vsel %vm80, %v56, 0
    %84 = vmatprep.subr.bf16.mxu0 0
    %85 = vmatpush1.bf16.msra.mxu0 %v76
    %86 = vmatprep.subr.bf16.mxu0 0
    %87 = vmatpush1.bf16.msra.mxu0 %v77
    %88 = vmatprep.subr.bf16.mxu0 0
    %89 = vmatpush1.bf16.msra.mxu0 0
    %90 = vmatprep.subr.bf16.mxu0 0
    %91 = vmatpush1.bf16.msra.mxu0 0
    %92 = vmatprep.subr.bf16.mxu0 0
    %93 = vmatpush1.bf16.msra.mxu0 0
    %94 = vmatprep.subr.bf16.mxu0 0
    %95 = vmatpush1.bf16.msra.mxu0 0
    %96 = vmatprep.subr.bf16.mxu0 0
    %97 = vmatpush1.bf16.msra.mxu0 0
    %98 = vmatprep.subr.bf16.mxu0 0
    %99 = vmatpush1.bf16.msra.mxu0 0
    %100 = vmatprep.subr.bf16.mxu0 0
    %101 = vmatpush1.bf16.msra.mxu0 0
    %102 = vmatprep.subr.bf16.mxu0 0
    %103 = vmatpush1.bf16.msra.mxu0 0
    %104 = vmatprep.subr.bf16.mxu0 0
    %105 = vmatpush1.bf16.msra.mxu0 0
    %106 = vmatprep.subr.bf16.mxu0 0
    %107 = vmatpush1.bf16.msra.mxu0 0
    %108 = vmatprep.subr.bf16.mxu0 0
    %109 = vmatpush1.bf16.msra.mxu0 0
    %110 = vmatprep.subr.bf16.mxu0 0
    %111 = vmatpush1.bf16.msra.mxu0 0
    %112 = vmatprep.subr.bf16.mxu0 0
    %113 = vmatpush1.bf16.msra.mxu0 0
    %114 = vmatprep.subr.bf16.mxu0 0
    %115 = vmatpush1.bf16.msra.mxu0 0
    %116 = vmatprep.mubr.bf16.mxu0 0
    %117 = vmatmul.mubr.bf16.gmra.mrb[0].mxu0 %v82
    %v118 = vpop.f32.mrb[0].mxu0
    %v119 = vadd.f32 %v66, %v118
    %v120 = vpop.f32.mrb[0].mxu0
    %v121 = vpop.f32.mrb[0].mxu0
    %v122 = vpop.f32.mrb[0].mxu0
    %123 = vdwg.mxu0
    %v124 = vmax.f32 %v119, 0.0
    %v125 = vpack.c.bf16 %v124, %v124
    %v126 = vld [vmem:[#allocation2] sm:$0xf]
    %v127 = vld [vmem:[#allocation2 + $0x4] sm:$0xf]
    %v128 = vld [vmem:[#allocation2 + $0x8] sm:$0xf]
    %v129 = vld [vmem:[#allocation2 + $0xc] sm:$0xf]
    %v130 = vld [vmem:[#allocation2 + $0x10] sm:$0xf]
    %v131 = vld [vmem:[#allocation2 + $0x14] sm:$0xf]
    %v132 = vld [vmem:[#allocation2 + $0x18] sm:$0xf]
    %v133 = vld [vmem:[#allocation2 + $0x1c] sm:$0xf]
    %v134 = vld [vmem:[#allocation2 + $0x20] sm:$0xf]
    %v135 = vld [vmem:[#allocation2 + $0x24] sm:$0xf]
    %v136 = vld [vmem:[#allocation2 + $0x28] sm:$0xf]
    %v137 = vld [vmem:[#allocation2 + $0x2c] sm:$0xf]
    %v138 = vld [vmem:[#allocation2 + $0x30] sm:$0xf]
    %v139 = vld [vmem:[#allocation2 + $0x34] sm:$0xf]
    %v140 = vld [vmem:[#allocation2 + $0x38] sm:$0xf]
    %v141 = vld [vmem:[#allocation2 + $0x3c] sm:$0xf]
    %v142 = vld [vmem:[%s4] sm:$0x1]
    %v144 = vlaneseq
    %v145 = vshrl.u32 %v144, 7
    %v146 = vsub.s32 0, %v145
    %v147 = vrot.slane %v142, %v146
    %v165 = vunpack.c.l.b16 %v126
    %v166 = vunpack.c.l.b16 %v127
    %v167 = vunpack.c.l.b16 %v128
    %v168 = vunpack.c.l.b16 %v129
    %v169 = vunpack.c.l.b16 %v130
    %v170 = vunpack.c.l.b16 %v131
    %v171 = vunpack.c.l.b16 %v132
    %v172 = vunpack.c.l.b16 %v133
    %v173 = vunpack.c.l.b16 %v134
    %v174 = vunpack.c.l.b16 %v135
    %v175 = vunpack.c.l.b16 %v136
    %v176 = vunpack.c.l.b16 %v137
    %v177 = vunpack.c.l.b16 %v138
    %v178 = vunpack.c.l.b16 %v139
    %v179 = vunpack.c.l.b16 %v140
    %v180 = vunpack.c.l.b16 %v141
    %v181 = vpack.c.b16 %v166, %v165
    %v182 = vpack.c.b16 %v168, %v167
    %v183 = vpack.c.b16 %v170, %v169
    %v184 = vpack.c.b16 %v172, %v171
    %v185 = vpack.c.b16 %v174, %v173
    %v186 = vpack.c.b16 %v176, %v175
    %v187 = vpack.c.b16 %v178, %v177
    %v188 = vpack.c.b16 %v180, %v179
    %197 = vmatprep.subr.bf16.mxu0 0
    %198 = vmatpush1.bf16.msra.mxu0 %v181
    %199 = vmatprep.subr.bf16.mxu0 0
    %200 = vmatpush1.bf16.msra.mxu0 %v182
    %201 = vmatprep.subr.bf16.mxu0 0
    %202 = vmatpush1.bf16.msra.mxu0 %v183
    %203 = vmatprep.subr.bf16.mxu0 0
    %204 = vmatpush1.bf16.msra.mxu0 %v184
    %205 = vmatprep.subr.bf16.mxu0 0
    %206 = vmatpush1.bf16.msra.mxu0 %v185
    %207 = vmatprep.subr.bf16.mxu0 0
    %208 = vmatpush1.bf16.msra.mxu0 %v186
    %209 = vmatprep.subr.bf16.mxu0 0
    %210 = vmatpush1.bf16.msra.mxu0 %v187
    %211 = vmatprep.subr.bf16.mxu0 0
    %212 = vmatpush1.bf16.msra.mxu0 %v188
    %213 = vmatprep.subr.bf16.mxu0 0
    %214 = vmatpush1.bf16.msra.mxu0 0
    %215 = vmatprep.subr.bf16.mxu0 0
    %216 = vmatpush1.bf16.msra.mxu0 0
    %217 = vmatprep.subr.bf16.mxu0 0
    %218 = vmatpush1.bf16.msra.mxu0 0
    %219 = vmatprep.subr.bf16.mxu0 0
    %220 = vmatpush1.bf16.msra.mxu0 0
    %221 = vmatprep.subr.bf16.mxu0 0
    %222 = vmatpush1.bf16.msra.mxu0 0
    %223 = vmatprep.subr.bf16.mxu0 0
    %224 = vmatpush1.bf16.msra.mxu0 0
    %225 = vmatprep.subr.bf16.mxu0 0
    %226 = vmatpush1.bf16.msra.mxu0 0
    %227 = vmatprep.subr.bf16.mxu0 0
    %228 = vmatpush1.bf16.msra.mxu0 0
    %229 = vmatprep.mubr.bf16.mxu0 0
    %230 = vmatmul.mubr.bf16.gmra.mrb[0].mxu0 %v125
    %v231 = vpop.f32.mrb[0].mxu0
    %v232 = vadd.f32 %v147, %v231
    %v233 = vpop.f32.mrb[0].mxu0
    %v234 = vpop.f32.mrb[0].mxu0
    %v235 = vpop.f32.mrb[0].mxu0
    %236 = vdwg.mxu0
    %v237 = vmax.f32 %v232, 0.0
    %v238 = vpack.c.bf16 %v237, %v237
    %v239 = vld [vmem:[#allocation4] sm:$0xf]
    %v240 = vld [vmem:[#allocation4 + $0x4] sm:$0xf]
    %v241 = vld [vmem:[#allocation4 + $0x8] sm:$0xf]
    %v242 = vld [vmem:[#allocation4 + $0xc] sm:$0xf]
    %v243 = vld [vmem:[#allocation4 + $0x10] sm:$0xf]
    %v244 = vld [vmem:[#allocation4 + $0x14] sm:$0xf]
    %v245 = vld [vmem:[#allocation4 + $0x18] sm:$0xf]
    %v246 = vld [vmem:[#allocation4 + $0x1c] sm:$0xf]
    %v247 = vld [vmem:[#allocation4 + $0x20] sm:$0xf]
    %v248 = vld [vmem:[#allocation4 + $0x24] sm:$0xf]
    %v249 = vld [vmem:[#allocation4 + $0x28] sm:$0xf]
    %v250 = vld [vmem:[#allocation4 + $0x2c] sm:$0xf]
    %v251 = vld [vmem:[#allocation4 + $0x30] sm:$0xf]
    %v252 = vld [vmem:[#allocation4 + $0x34] sm:$0xf]
    %v253 = vld [vmem:[#allocation4 + $0x38] sm:$0xf]
    %v254 = vld [vmem:[#allocation4 + $0x3c] sm:$0xf]
    %v255 = vld [vmem:[%s6] sm:$0x1]
    %v257 = vlaneseq
    %v258 = vshrl.u32 %v257, 7
    %v259 = vsub.s32 0, %v258
    %v260 = vrot.slane %v255, %v259
    %v278 = vunpack.c.l.b16 %v239
    %v279 = vunpack.c.l.b16 %v240
    %v280 = vunpack.c.l.b16 %v241
    %v281 = vunpack.c.l.b16 %v242
    %v282 = vunpack.c.l.b16 %v243
    %v283 = vunpack.c.l.b16 %v244
    %v284 = vunpack.c.l.b16 %v245
    %v285 = vunpack.c.l.b16 %v246
    %v286 = vunpack.c.l.b16 %v247
    %v287 = vunpack.c.l.b16 %v248
    %v288 = vunpack.c.l.b16 %v249
    %v289 = vunpack.c.l.b16 %v250
    %v290 = vunpack.c.l.b16 %v251
    %v291 = vunpack.c.l.b16 %v252
    %v292 = vunpack.c.l.b16 %v253
    %v293 = vunpack.c.l.b16 %v254
    %v294 = vpack.c.b16 %v279, %v278
    %v295 = vpack.c.b16 %v281, %v280
    %v296 = vpack.c.b16 %v283, %v282
    %v297 = vpack.c.b16 %v285, %v284
    %v298 = vpack.c.b16 %v287, %v286
    %v299 = vpack.c.b16 %v289, %v288
    %v300 = vpack.c.b16 %v291, %v290
    %v301 = vpack.c.b16 %v293, %v292
    %310 = vmatprep.subr.bf16.mxu0 0
    %311 = vmatpush1.bf16.msra.mxu0 %v294
    %312 = vmatprep.subr.bf16.mxu0 0
    %313 = vmatpush1.bf16.msra.mxu0 %v295
    %314 = vmatprep.subr.bf16.mxu0 0
    %315 = vmatpush1.bf16.msra.mxu0 %v296
    %316 = vmatprep.subr.bf16.mxu0 0
    %317 = vmatpush1.bf16.msra.mxu0 %v297
    %318 = vmatprep.subr.bf16.mxu0 0
    %319 = vmatpush1.bf16.msra.mxu0 %v298
    %320 = vmatprep.subr.bf16.mxu0 0
    %321 = vmatpush1.bf16.msra.mxu0 %v299
    %322 = vmatprep.subr.bf16.mxu0 0
    %323 = vmatpush1.bf16.msra.mxu0 %v300
    %324 = vmatprep.subr.bf16.mxu0 0
    %325 = vmatpush1.bf16.msra.mxu0 %v301
    %326 = vmatprep.subr.bf16.mxu0 0
    %327 = vmatpush1.bf16.msra.mxu0 0
    %328 = vmatprep.subr.bf16.mxu0 0
    %329 = vmatpush1.bf16.msra.mxu0 0
    %330 = vmatprep.subr.bf16.mxu0 0
    %331 = vmatpush1.bf16.msra.mxu0 0
    %332 = vmatprep.subr.bf16.mxu0 0
    %333 = vmatpush1.bf16.msra.mxu0 0
    %334 = vmatprep.subr.bf16.mxu0 0
    %335 = vmatpush1.bf16.msra.mxu0 0
    %336 = vmatprep.subr.bf16.mxu0 0
    %337 = vmatpush1.bf16.msra.mxu0 0
    %338 = vmatprep.subr.bf16.mxu0 0
    %339 = vmatpush1.bf16.msra.mxu0 0
    %340 = vmatprep.subr.bf16.mxu0 0
    %341 = vmatpush1.bf16.msra.mxu0 0
    %342 = vmatprep.mubr.bf16.mxu0 0
    %343 = vmatmul.mubr.bf16.gmra.mrb[0].mxu0 %v238
    %v344 = vpop.f32.mrb[0].mxu0
    %v345 = vadd.f32 %v260, %v344
    %v346 = vpop.f32.mrb[0].mxu0
    %v347 = vpop.f32.mrb[0].mxu0
    %v348 = vpop.f32.mrb[0].mxu0
    %349 = vdwg.mxu0
    %v350 = vtanh.pop %v345
    %v351 = vpack.c.bf16 %v350, %v350
    %352 = vst [vmem:[%s7] sm:$0xf] %v351
    // Predicated region
    $region38: #{actor_forward.1} parent=1 // pred_check
      _
    $region39: #{actor_forward.1} parent=1 // pred_check_branch
      %354 = sbr.rel (0) target = $region41
    $region40: #{actor_forward.1} parent=1 // pred_region
      _
    $region41: #{actor_forward.1} parent=1 // pred_fallthru
      _
    // Predicated region
    $region42: #{actor_forward.1} parent=1 // pred_check
      _
    $region43: #{actor_forward.1} parent=1 // pred_check_branch
      %356 = sbr.rel (0) target = $region45
    $region44: #{actor_forward.1} parent=1 // pred_region
      _
    $region45: #{actor_forward.1} parent=1 // pred_fallthru
      _
    %357 = vsyncpa [#allocation3], 1
    %358 = vsyncpa [#allocation5], 1

</llo_original>
